<compile_context>
chip_gen: v7x
topology: tpu7x:2x2x1
jax: 0.10.0
libtpu: 0.0.40
codegen_flags: <defaults>
</compile_context>

<pallas_src>
import math

import jax
import jax.numpy as jnp
import numpy as np
from jax.experimental import pallas as pl
from jax.experimental.pallas import tpu as pltpu


# ----------------------------- host-side helpers -----------------------------


def _membership_matrix(in_size: int, out_size: int) -> np.ndarray:
    """(out_size, in_size) 0/1 window-membership matrix (PyTorch boundaries)."""
    m = np.zeros((out_size, in_size), dtype=np.float32)
    for i in range(out_size):
        start = (i * in_size) // out_size
        end = -((-(i + 1) * in_size) // out_size)  # ceil((i+1)*in/out)
        m[i, start:end] = 1.0
    return m


def _combined_mask_and_scale(H: int, W: int, oh: int, ow: int):
    """Returns (mask (H*W, oh*ow) of 0/1, scale (1, oh*ow) f32 = 1/window-size)."""
    mh = _membership_matrix(H, oh)  # (oh, H)
    mw = _membership_matrix(W, ow)  # (ow, W)
    # mask[(h*W + w), (i*ow + j)] = mh[i, h] * mw[j, w]
    mask = np.einsum("ih,jw->hwij", mh, mw).reshape(H * W, oh * ow)
    counts = np.einsum("ih,jw->ij", mh, mw).reshape(1, oh * ow)
    scale = (1.0 / counts).astype(np.float32)
    return mask, scale


def _vmem_capacity_bytes() -> int:
    """Physical per-TensorCore VMEM; conservative (v7x) fallback if unknown."""
    try:
        info = pltpu.get_tpu_info()
        cap = int(getattr(info, "vmem_capacity_bytes", 0) or 0)
        if cap > 0:
            return cap
    except Exception:
        pass
    return 64 * 1024 * 1024


def _choose_tile(n: int, per_row_bytes: int, budget: int, other_steps: int) -> int:
    """Channel-block size TC along the pooled (N) axis of length `n`.

    TC must be a multiple of 128 (output lane dim) unless it equals `n`.
    Keeps one x tile inside `budget`, and halves TC (down to 128) until the
    grid has >= 4 steps so v7x's two TensorCores both get work and the DMA
    pipeline has something to overlap.
    """
    cap = max(1, budget // max(1, per_row_bytes))
    if n <= cap or n <= 128:
        tc = n
    else:
        tc = max(128, (cap // 128) * 128)
    while other_steps * pl.cdiv(n, tc) < 4 and tc > 128:
        new_tc = max(128, ((tc // 2) // 128) * 128)
        if new_tc == tc:
            break
        tc = new_tc
    return tc


# --------------------------------- the kernel --------------------------------


def _avgpool_kernel(a_t_ref, scale_ref, x_ref, o_ref):
    # a_t_ref:   (H*W, OH*OW)  0/1 membership matrix (resident, loaded once)
    # scale_ref: (1, OH*OW)    f32 reciprocal window sizes
    # x_ref:     (TC, H*W)     TC channel slabs, spatially flattened (lane-dense)
    # o_ref:     (OH*OW, TC)   channel-last output block (lane-dense stores)
    #
    # Canonical (M=TC, K=HW) @ (K=HW, N=OHW) MXU matmul with f32 accumulation:
    # x keeps its natural layout (no big-slab relayout); only the small
    # (TC, OH*OW) f32 result is transposed before the lane-dense store.
    y = jnp.dot(x_ref[...], a_t_ref[...], preferred_element_type=jnp.float32)
    y = y * scale_ref[...]                      # exact f32 1/count rescale
    o_ref[...] = y.T.astype(o_ref.dtype)


# --------------------------------- the wrapper --------------------------------


def avg_pool_forward(x: jax.Array, num_spixels):
    """Pallas implementation of AvgPool.forward.

    Args:
      x: (B, C, H, W) array (NCHW, same as PyTorch).
      num_spixels: int (perfect square) or (oh, ow) tuple.

    Returns:
      (tokens, None) where tokens has shape (B, oh*ow, C).
    """
    if isinstance(num_spixels, tuple):
        assert len(num_spixels) == 2
        oh, ow = num_spixels
    else:
        r = int(math.sqrt(num_spixels))
        assert r * r == num_spixels
        oh, ow = r, r

    B, C, H, W = x.shape
    HW, OHW = H * W, oh * ow
    itemsize = jnp.dtype(x.dtype).itemsize

    mask_np, scale_np = _combined_mask_and_scale(H, W, oh, ow)
    # 0/1 mask in x's dtype (exact in bf16/fp16); normalization stays in f32.
    a_t = jnp.asarray(mask_np, dtype=x.dtype)           # (HW, OHW)
    scale = jnp.asarray(scale_np, dtype=jnp.float32)    # (1, OHW)

    vmem_cap = _vmem_capacity_bytes()
    # ~16 MiB x-tiles on 128 MiB parts (v5e/v6e), ~8 MiB on 64 MiB v7x.
    tile_budget = (16 << 20) if vmem_cap >= (100 << 20) else (8 << 20)

    fused = C >= 128
    if fused:
        n_axis, other_steps = C, B          # grid = (B, ceil(C/TC))
    else:
        n_axis, other_steps = B * C, 1      # grid = (ceil(B*C/TC),)
    TC = _choose_tile(n_axis, HW * itemsize, tile_budget, other_steps)

    # VMEM accounting: double-buffered x / out tiles + single-buffered A.
    a_bytes = HW * OHW * itemsize
    x_buf = 2 * TC * HW * itemsize
    o_buf = 2 * OHW * TC * itemsize
    need = a_bytes + x_buf + o_buf + scale.size * 4
    vmem_limit = int(min(0.75 * vmem_cap, max(32 << 20, need + (4 << 20))))

    flops = 2 * B * C * OHW * HW
    bytes_accessed = B * C * HW * itemsize + a_bytes + B * OHW * C * itemsize
    cost = pl.CostEstimate(
        flops=flops, transcendentals=0, bytes_accessed=bytes_accessed
    )

    def build(single_buffer_a: bool):
        # The pooling matrix's index_map is constant: one buffer is enough.
        a_kwargs = {"pipeline_mode": pl.Buffered(1)} if single_buffer_a else {}
        if fused:
            grid = (B, pl.cdiv(C, TC))
            in_specs = [
                pl.BlockSpec((HW, OHW), lambda b, cb: (0, 0), **a_kwargs),
                pl.BlockSpec((1, OHW), lambda b, cb: (0, 0)),
                pl.BlockSpec((None, TC, HW), lambda b, cb: (b, cb, 0)),
            ]
            out_specs = pl.BlockSpec((None, OHW, TC), lambda b, cb: (b, 0, cb))
            out_shape = jax.ShapeDtypeStruct((B, OHW, C), x.dtype)
            semantics = ("parallel", "parallel")
            x_arg = x.reshape(B, C, HW)
        else:
            grid = (pl.cdiv(B * C, TC),)
            in_specs = [
                pl.BlockSpec((HW, OHW), lambda i: (0, 0), **a_kwargs),
                pl.BlockSpec((1, OHW), lambda i: (0, 0)),
                pl.BlockSpec((TC, HW), lambda i: (i, 0)),
            ]
            out_specs = pl.BlockSpec((OHW, TC), lambda i: (0, i))
            out_shape = jax.ShapeDtypeStruct((OHW, B * C), x.dtype)
            semantics = ("parallel",)
            x_arg = x.reshape(B * C, HW)

        return pl.pallas_call(
            _avgpool_kernel,
            out_shape=out_shape,
            grid=grid,
            in_specs=in_specs,
            out_specs=out_specs,
            compiler_params=pltpu.CompilerParams(
                dimension_semantics=semantics,
                vmem_limit_bytes=vmem_limit,
            ),
            cost_estimate=cost,
        )(a_t, scale, x_arg)

    try:
        out = build(single_buffer_a=True)
    except Exception:
        # Fallback if this JAX version rejects pl.Buffered(1) for inputs.
        out = build(single_buffer_a=False)

    if fused:
        tokens = out                                        # (B, OHW, C) already
    else:
        # Tiny output re-layout (touches ~OHW/HW of total traffic).
        tokens = out.reshape(OHW, B, C).transpose(1, 0, 2)  # -> (B, OHW, C)
    return tokens, None


# ----------------------------------- tests -----------------------------------


def _ref_adaptive_avg_pool(x_np: np.ndarray, oh: int, ow: int) -> np.ndarray:
    """Pure-numpy AdaptiveAvgPool2d reference (PyTorch window boundaries)."""
    B, C, H, W = x_np.shape
    out = np.zeros((B, C, oh, ow), dtype=np.float64)
    for i in range(oh):
        hs, he = (i * H) // oh, -((-(i + 1) * H) // oh)
        for j in range(ow):
            ws, we = (j * W) // ow, -((-(j + 1) * W) // ow)
            out[:, :, i, j] = x_np[:, :, hs:he, ws:we].mean(axis=(2, 3))
    return out.astype(np.float32)


if __name__ == "__main__":
    key = jax.random.PRNGKey(0)

    # --- Test 1: small-C (batch-folded) path, divisible windows ---
    B, C, H, W = 2, 4, 16, 16
    num_spixels = 16  # -> (4, 4)
    x = jax.random.normal(key, (B, C, H, W), dtype=jnp.float32)
    tokens, extra = avg_pool_forward(x, num_spixels)
    tokens = jax.block_until_ready(tokens)
    ref = x.reshape(B, C, 4, H // 4, 4, W // 4).mean(axis=(3, 5))
    ref = ref.reshape(B, C, -1).transpose(0, 2, 1)
    assert tokens.shape == (B, num_spixels, C)
    assert extra is None
    np.testing.assert_allclose(np.asarray(tokens), np.asarray(ref),
                               rtol=1e-5, atol=1e-5)

    # --- Test 2: non-divisible adaptive windows, tuple arg ---
    x2 = jax.random.normal(jax.random.PRNGKey(1), (2, 8, 13, 17),
                           dtype=jnp.float32)
    tokens2, _ = avg_pool_forward(x2, (4, 4))
    tokens2 = jax.block_until_ready(tokens2)
    ref2 = _ref_adaptive_avg_pool(np.asarray(x2), 4, 4)
    ref2 = ref2.reshape(2, 8, -1).transpose(0, 2, 1)
    assert tokens2.shape == (2, 16, 8)
    np.testing.assert_allclose(np.asarray(tokens2), ref2, rtol=1e-5, atol=1e-5)

    # --- Test 3: large-C fused path (direct (B, OHW, C) stores) with a
    #     partial trailing channel block (C=192 -> TC=128 after grid split) ---
    B3, C3, H3, W3 = 2, 192, 8, 8
    x3 = jax.random.normal(jax.random.PRNGKey(2), (B3, C3, H3, W3),
                           dtype=jnp.float32)
    tokens3, _ = avg_pool_forward(x3, 4)  # -> (2, 2)
    tokens3 = jax.block_until_ready(tokens3)
    ref3 = x3.reshape(B3, C3, 2, H3 // 2, 2, W3 // 2).mean(axis=(3, 5))
    ref3 = ref3.reshape(B3, C3, -1).transpose(0, 2, 1)
    assert tokens3.shape == (B3, 4, C3)
    np.testing.assert_allclose(np.asarray(tokens3), np.asarray(ref3),
                               rtol=1e-5, atol=1e-5)

    # --- Test 4: bf16 input — 0/1 mask + f32 rescale keeps numerics tight ---
    xb = jax.random.normal(jax.random.PRNGKey(3), (2, 4, 16, 16),
                           dtype=jnp.bfloat16)
    tokensb, _ = avg_pool_forward(xb, 16)
    tokensb = jax.block_until_ready(tokensb)
    refb = xb.astype(jnp.float32).reshape(2, 4, 4, 4, 4, 4).mean(axis=(3, 5))
    refb = refb.reshape(2, 4, -1).transpose(0, 2, 1)
    np.testing.assert_allclose(np.asarray(tokensb, dtype=np.float32),
                               np.asarray(refb), rtol=2e-2, atol=2e-2)

    print("KERNEL_OK")
</pallas_src>

<mosaic_0001>
module attributes {stable_mosaic.version = 11 : i64} {
  func.func @_avgpool_kernel(%arg0: i32, %arg1: memref<256x16xf32, #tpu.memory_space<vmem>>, %arg2: memref<1x16xf32, #tpu.memory_space<vmem>>, %arg3: memref<8x256xf32, #tpu.memory_space<vmem>>, %arg4: memref<16x8xf32, #tpu.memory_space<vmem>>) attributes {dimension_semantics = [#tpu.dimension_semantics<parallel>], iteration_bounds = array<i64: 1>, scalar_prefetch = 0 : i64, scratch_operands = 0 : i64, tpu.core_type = #tpu.core_type<tc>, window_params = [{pipeline_mode = #tpu.pipeline_mode<synchronous>, transform_indices = @transform_0, window_bounds = array<i64: 256, 16>}, {pipeline_mode = #tpu.pipeline_mode<synchronous>, transform_indices = @transform_1, window_bounds = array<i64: 1, 16>}, {transform_indices = @transform_2, window_bounds = array<i64: 8, 256>}, {transform_indices = @transform_3, window_bounds = array<i64: 16, 8>}]} {
    %c0 = arith.constant 0 : index
    %c0_0 = arith.constant 0 : index
    %0 = vector.load %arg3[%c0, %c0_0] : memref<8x256xf32, #tpu.memory_space<vmem>>, vector<8x256xf32>
    %c0_1 = arith.constant 0 : index
    %c0_2 = arith.constant 0 : index
    %1 = vector.load %arg1[%c0_1, %c0_2] : memref<256x16xf32, #tpu.memory_space<vmem>>, vector<256x16xf32>
    %cst = arith.constant dense<0.000000e+00> : vector<8x16xf32>
    %2 = tpu.matmul %0, %1, %cst {dimension_numbers = #tpu.dot_dimension_numbers<[1], [0], [0], [1], [0, 0, 1, 1], [], []>} : vector<8x256xf32>, vector<256x16xf32>, vector<8x16xf32> -> vector<8x16xf32>
    %c0_3 = arith.constant 0 : index
    %c0_4 = arith.constant 0 : index
    %3 = vector.load %arg2[%c0_3, %c0_4] : memref<1x16xf32, #tpu.memory_space<vmem>>, vector<1x16xf32>
    %4 = vector.broadcast %3 : vector<1x16xf32> to vector<8x16xf32>
    %5 = arith.mulf %2, %4 : vector<8x16xf32>
    %6 = tpu.transpose %5, [1, 0] : vector<8x16xf32> -> vector<16x8xf32>
    %c0_5 = arith.constant 0 : index
    %c0_6 = arith.constant 0 : index
    %7 = vector.load %arg4[%c0_5, %c0_6] : memref<16x8xf32, #tpu.memory_space<vmem>>, vector<16x8xf32>
    tpu.vector_store %arg4[%c0_5, %c0_6], %6 {strides = array<i32>} : memref<16x8xf32, #tpu.memory_space<vmem>>, vector<16x8xf32>,
    return
  }
  func.func @transform_0(%arg0: i32) -> (i32, i32) {
    %c0_i32 = arith.constant 0 : i32
    %c0_i32_0 = arith.constant 0 : i32
    %c0_i32_1 = arith.constant 0 : i32
    return %c0_i32, %c0_i32_0 : i32, i32
  }
  func.func @transform_1(%arg0: i32) -> (i32, i32) {
    %c0_i32 = arith.constant 0 : i32
    %c0_i32_0 = arith.constant 0 : i32
    %c0_i32_1 = arith.constant 0 : i32
    return %c0_i32, %c0_i32_0 : i32, i32
  }
  func.func @transform_2(%arg0: i32) -> (i32, i32) {
    %c0_i32 = arith.constant 0 : i32
    %c0_i32_0 = arith.constant 0 : i32
    return %arg0, %c0_i32 : i32, i32
  }
  func.func @transform_3(%arg0: i32) -> (i32, i32) {
    %c0_i32 = arith.constant 0 : i32
    %c0_i32_0 = arith.constant 0 : i32
    return %c0_i32, %arg0 : i32, i32
  }
}

module attributes {stable_mosaic.version = 11 : i64} {
  func.func @_avgpool_kernel(%arg0: i32, %arg1: memref<256x16xf32, #tpu.memory_space<vmem>>, %arg2: memref<1x16xf32, #tpu.memory_space<vmem>>, %arg3: memref<8x256xf32, #tpu.memory_space<vmem>>, %arg4: memref<16x8xf32, #tpu.memory_space<vmem>>) attributes {dimension_semantics = [#tpu.dimension_semantics<parallel>], iteration_bounds = array<i64: 1>, scalar_prefetch = 0 : i64, scratch_operands = 0 : i64, tpu.core_type = #tpu.core_type<tc>, window_params = [{pipeline_mode = #tpu.pipeline_mode<synchronous>, transform_indices = @transform_0, window_bounds = array<i64: 256, 16>}, {pipeline_mode = #tpu.pipeline_mode<synchronous>, transform_indices = @transform_1, window_bounds = array<i64: 1, 16>}, {transform_indices = @transform_2, window_bounds = array<i64: 8, 256>}, {transform_indices = @transform_3, window_bounds = array<i64: 16, 8>}]} {
    %c0 = arith.constant 0 : index
    %c0_0 = arith.constant 0 : index
    %0 = vector.load %arg3[%c0, %c0_0] : memref<8x256xf32, #tpu.memory_space<vmem>>, vector<8x256xf32>
    %c0_1 = arith.constant 0 : index
    %c0_2 = arith.constant 0 : index
    %1 = vector.load %arg1[%c0_1, %c0_2] : memref<256x16xf32, #tpu.memory_space<vmem>>, vector<256x16xf32>
    %cst = arith.constant dense<0.000000e+00> : vector<8x16xf32>
    %2 = tpu.matmul %0, %1, %cst {dimension_numbers = #tpu.dot_dimension_numbers<[1], [0], [0], [1], [0, 0, 1, 1], [], []>} : vector<8x256xf32>, vector<256x16xf32>, vector<8x16xf32> -> vector<8x16xf32>
    %c0_3 = arith.constant 0 : index
    %c0_4 = arith.constant 0 : index
    %3 = vector.load %arg2[%c0_3, %c0_4] : memref<1x16xf32, #tpu.memory_space<vmem>>, vector<1x16xf32>
    %4 = vector.broadcast %3 : vector<1x16xf32> to vector<8x16xf32>
    %5 = arith.mulf %2, %4 : vector<8x16xf32>
    %6 = tpu.transpose %5, [1, 0] : vector<8x16xf32> -> vector<16x8xf32>
    %c0_5 = arith.constant 0 : index
    %c0_6 = arith.constant 0 : index
    %7 = vector.load %arg4[%c0_5, %c0_6] : memref<16x8xf32, #tpu.memory_space<vmem>>, vector<16x8xf32>
    tpu.vector_store %arg4[%c0_5, %c0_6], %6 {strides = array<i32>} : memref<16x8xf32, #tpu.memory_space<vmem>>, vector<16x8xf32>,
    return
  }
  func.func @transform_0(%arg0: i32) -> (i32, i32) {
    %c0_i32 = arith.constant 0 : i32
    %c0_i32_0 = arith.constant 0 : i32
    %c0_i32_1 = arith.constant 0 : i32
    return %c0_i32, %c0_i32_0 : i32, i32
  }
  func.func @transform_1(%arg0: i32) -> (i32, i32) {
    %c0_i32 = arith.constant 0 : i32
    %c0_i32_0 = arith.constant 0 : i32
    %c0_i32_1 = arith.constant 0 : i32
    return %c0_i32, %c0_i32_0 : i32, i32
  }
  func.func @transform_2(%arg0: i32) -> (i32, i32) {
    %c0_i32 = arith.constant 0 : i32
    %c0_i32_0 = arith.constant 0 : i32
    return %arg0, %c0_i32 : i32, i32
  }
  func.func @transform_3(%arg0: i32) -> (i32, i32) {
    %c0_i32 = arith.constant 0 : i32
    %c0_i32_0 = arith.constant 0 : i32
    return %c0_i32, %arg0 : i32, i32
  }
}

</mosaic_0001>

<llo_original>
// kernel: tpu_custom_call.1
$region0: #{tpu_custom_call.1}
  #allocation0 [shape = 'u32[]', space=smem, size = 0x4, offset = 0x4, fixed_abs, tag = 'smem constant byte address 0x4 - core index']
  #allocation1 [shape = 'u32[144,128]{1,0:T(1,128)}', space=vmem, size = 0x12000, scoped, tag = 'internal scratch']
  %s0 = inlined_call_operand.vmem [shape: f32[256,16], index: 0, kind: input, shape index: {}]
  %s1 = inlined_call_operand.vmem [shape: f32[1,16], index: 1, kind: input, shape index: {}]
  %s2 = inlined_call_operand.vmem [shape: f32[8,256], index: 2, kind: input, shape index: {}]
  %s3 = inlined_call_operand.vmem [shape: f32[16,8], index: 3, kind: output, shape index: {}]
  %s4 = sld [smem:[#allocation0]]
  $region22: #{tpu_custom_call.1} parent=0
    _
  %s6 = ssub.s32 1, %s4
  %s7 = scalar_select 0, %s6, %s4
  // Predicated region
  $region2: #{tpu_custom_call.1} parent=0 // pred_check
    _
  $region3: #{tpu_custom_call.1} parent=0 // pred_check_branch
    %9 = sbr.rel (0) target = $region5
  $region4: #{tpu_custom_call.1} parent=0 // pred_region
    _
  $region5: #{tpu_custom_call.1} parent=0 // pred_fallthru
    _
  // Predicated region
  $region6: #{tpu_custom_call.1} parent=0 // pred_check
    _
  $region7: #{tpu_custom_call.1} parent=0 // pred_check_branch
    %11 = sbr.rel (0) target = $region9
  $region8: #{tpu_custom_call.1} parent=0 // pred_region
    _
  $region9: #{tpu_custom_call.1} parent=0 // pred_fallthru
    _
  // Predicated region
  $region10: #{tpu_custom_call.1} parent=0 // pred_check
    _
  $region11: #{tpu_custom_call.1} parent=0 // pred_check_branch
    %13 = sbr.rel (0) target = $region13
  $region12: #{tpu_custom_call.1} parent=0 // pred_region
    _
  $region13: #{tpu_custom_call.1} parent=0 // pred_fallthru
    _
  %v14 = vld [vmem:[%s2] sm:$0xff]
  %v15 = vld [vmem:[%s2 + $0x8] sm:$0xff]
  %v16 = vld [vmem:[%s0] sm:$0xff]
  %v17 = vld [vmem:[%s0 + $0x8] sm:$0xff]
  %v18 = vld [vmem:[%s0 + $0x10] sm:$0xff]
  %v19 = vld [vmem:[%s0 + $0x18] sm:$0xff]
  %v20 = vld [vmem:[%s0 + $0x20] sm:$0xff]
  %v21 = vld [vmem:[%s0 + $0x28] sm:$0xff]
  %v22 = vld [vmem:[%s0 + $0x30] sm:$0xff]
  %v23 = vld [vmem:[%s0 + $0x38] sm:$0xff]
  %v24 = vld [vmem:[%s0 + $0x40] sm:$0xff]
  %v25 = vld [vmem:[%s0 + $0x48] sm:$0xff]
  %v26 = vld [vmem:[%s0 + $0x50] sm:$0xff]
  %v27 = vld [vmem:[%s0 + $0x58] sm:$0xff]
  %v28 = vld [vmem:[%s0 + $0x60] sm:$0xff]
  %v29 = vld [vmem:[%s0 + $0x68] sm:$0xff]
  %v30 = vld [vmem:[%s0 + $0x70] sm:$0xff]
  %v31 = vld [vmem:[%s0 + $0x78] sm:$0xff]
  %v32 = vld [vmem:[%s0 + $0x80] sm:$0xff]
  %v33 = vld [vmem:[%s0 + $0x88] sm:$0xff]
  %v34 = vld [vmem:[%s0 + $0x90] sm:$0xff]
  %v35 = vld [vmem:[%s0 + $0x98] sm:$0xff]
  %v36 = vld [vmem:[%s0 + $0xa0] sm:$0xff]
  %v37 = vld [vmem:[%s0 + $0xa8] sm:$0xff]
  %v38 = vld [vmem:[%s0 + $0xb0] sm:$0xff]
  %v39 = vld [vmem:[%s0 + $0xb8] sm:$0xff]
  %v40 = vld [vmem:[%s0 + $0xc0] sm:$0xff]
  %v41 = vld [vmem:[%s0 + $0xc8] sm:$0xff]
  %v42 = vld [vmem:[%s0 + $0xd0] sm:$0xff]
  %v43 = vld [vmem:[%s0 + $0xd8] sm:$0xff]
  %v44 = vld [vmem:[%s0 + $0xe0] sm:$0xff]
  %v45 = vld [vmem:[%s0 + $0xe8] sm:$0xff]
  %v46 = vld [vmem:[%s0 + $0xf0] sm:$0xff]
  %v47 = vld [vmem:[%s0 + $0xf8] sm:$0xff]
  %48 = vmatprep.subr.mxu0 0.0
  %49 = vmatpush1.msra.mxu0 %v16
  %50 = vmatprep.subr.mxu0 0.0
  %51 = vmatpush1.msra.mxu0 %v17
  %52 = vmatprep.subr.mxu0 0.0
  %53 = vmatpush1.msra.mxu0 %v18
  %54 = vmatprep.subr.mxu0 0.0
  %55 = vmatpush1.msra.mxu0 %v19
  %56 = vmatprep.subr.mxu0 0.0
  %57 = vmatpush1.msra.mxu0 %v20
  %58 = vmatprep.subr.mxu0 0.0
  %59 = vmatpush1.msra.mxu0 %v21
  %60 = vmatprep.subr.mxu0 0.0
  %61 = vmatpush1.msra.mxu0 %v22
  %62 = vmatprep.subr.mxu0 0.0
  %63 = vmatpush1.msra.mxu0 %v23
  %64 = vmatprep.subr.mxu0 0.0
  %65 = vmatpush1.msra.mxu0 %v24
  %66 = vmatprep.subr.mxu0 0.0
  %67 = vmatpush1.msra.mxu0 %v25
  %68 = vmatprep.subr.mxu0 0.0
  %69 = vmatpush1.msra.mxu0 %v26
  %70 = vmatprep.subr.mxu0 0.0
  %71 = vmatpush1.msra.mxu0 %v27
  %72 = vmatprep.subr.mxu0 0.0
  %73 = vmatpush1.msra.mxu0 %v28
  %74 = vmatprep.subr.mxu0 0.0
  %75 = vmatpush1.msra.mxu0 %v29
  %76 = vmatprep.subr.mxu0 0.0
  %77 = vmatpush1.msra.mxu0 %v30
  %78 = vmatprep.subr.mxu0 0.0
  %79 = vmatpush1.msra.mxu0 %v31
  %80 = vmatprep.subr.mxu0 0.0
  %81 = vmatpush1.msra.mxu0 %v32
  %82 = vmatprep.subr.mxu0 0.0
  %83 = vmatpush1.msra.mxu0 %v33
  %84 = vmatprep.subr.mxu0 0.0
  %85 = vmatpush1.msra.mxu0 %v34
  %86 = vmatprep.subr.mxu0 0.0
  %87 = vmatpush1.msra.mxu0 %v35
  %88 = vmatprep.subr.mxu0 0.0
  %89 = vmatpush1.msra.mxu0 %v36
  %90 = vmatprep.subr.mxu0 0.0
  %91 = vmatpush1.msra.mxu0 %v37
  %92 = vmatprep.subr.mxu0 0.0
  %93 = vmatpush1.msra.mxu0 %v38
  %94 = vmatprep.subr.mxu0 0.0
  %95 = vmatpush1.msra.mxu0 %v39
  %96 = vmatprep.subr.mxu0 0.0
  %97 = vmatpush1.msra.mxu0 %v40
  %98 = vmatprep.subr.mxu0 0.0
  %99 = vmatpush1.msra.mxu0 %v41
  %100 = vmatprep.subr.mxu0 0.0
  %101 = vmatpush1.msra.mxu0 %v42
  %102 = vmatprep.subr.mxu0 0.0
  %103 = vmatpush1.msra.mxu0 %v43
  %104 = vmatprep.subr.mxu0 0.0
  %105 = vmatpush1.msra.mxu0 %v44
  %106 = vmatprep.subr.mxu0 0.0
  %107 = vmatpush1.msra.mxu0 %v45
  %108 = vmatprep.subr.mxu0 0.0
  %109 = vmatpush1.msra.mxu0 %v46
  %110 = vmatprep.subr.mxu0 0.0
  %111 = vmatpush1.msra.mxu0 %v47
  %112 = vmatprep.mubr.f32.mxu0 %v15
  %113 = vmatmul.mubr.f32.gmra.mrb[0].mxu0 %v14
  %v114 = vpop.f32.mrb[0].mxu0
  %v115 = vadd.f32 0.0, %v114
  %v116 = vpop.f32.mrb[0].mxu0
  %117 = vdwg.mxu0
  %v118 = vld [vmem:[%s1] sm:$0x1]
  %v120 = vlaneseq
  %v121 = vshrl.u32 %v120, 7
  %v122 = vsub.s32 0, %v121
  %v123 = vrot.slane %v118, %v122
  %v125 = vmul.f32 %v115, %v123
  %126 = vxpose.xlu0.b32.start [1/16] %v125, 128
  %127 = vxpose.xlu0.b32.cont [2/16] 0.0, 128
  %128 = vxpose.xlu0.b32.cont [3/16] 0.0, 128
  %129 = vxpose.xlu0.b32.cont [4/16] 0.0, 128
  %130 = vxpose.xlu0.b32.cont [5/16] 0.0, 128
  %131 = vxpose.xlu0.b32.cont [6/16] 0.0, 128
  %132 = vxpose.xlu0.b32.cont [7/16] 0.0, 128
  %133 = vxpose.xlu0.b32.cont [8/16] 0.0, 128
  %134 = vxpose.xlu0.b32.cont [9/16] 0.0, 128
  %135 = vxpose.xlu0.b32.cont [10/16] 0.0, 128
  %136 = vxpose.xlu0.b32.cont [11/16] 0.0, 128
  %137 = vxpose.xlu0.b32.cont [12/16] 0.0, 128
  %138 = vxpose.xlu0.b32.cont [13/16] 0.0, 128
  %139 = vxpose.xlu0.b32.cont [14/16] 0.0, 128
  %140 = vxpose.xlu0.b32.cont [15/16] 0.0, 128
  %141 = vxpose.xlu0.b32.end [16/16] 0.0, 128
  %v142 = vpop.trf.xlu0
  %v143 = vpop.trf.xlu0
  %v144 = vpop.trf.xlu0
  %v145 = vpop.trf.xlu0
  %v146 = vpop.trf.xlu0
  %v147 = vpop.trf.xlu0
  %v148 = vpop.trf.xlu0
  %v149 = vpop.trf.xlu0
  %v150 = vpop.trf.xlu0
  %v151 = vpop.trf.xlu0
  %v152 = vpop.trf.xlu0
  %v153 = vpop.trf.xlu0
  %v154 = vpop.trf.xlu0
  %v155 = vpop.trf.xlu0
  %v156 = vpop.trf.xlu0
  %v157 = vpop.trf.xlu0
  %vm158 = vcmask 64512
  %159 = vst.msk [vmem:[%s3] sm:$0xff] %vm158, %v142
  %160 = vst.msk [vmem:[%s3 + $0x8] sm:$0xff] %vm158, %v143
  // Predicated region
  $region14: #{tpu_custom_call.1} parent=0 // pred_check
    _
  $region15: #{tpu_custom_call.1} parent=0 // pred_check_branch
    %162 = sbr.rel (0) target = $region17
  $region16: #{tpu_custom_call.1} parent=0 // pred_region
    _
  $region17: #{tpu_custom_call.1} parent=0 // pred_fallthru
    _
  // Predicated region
  $region18: #{tpu_custom_call.1} parent=0 // pred_check
    _
  $region19: #{tpu_custom_call.1} parent=0 // pred_check_branch
    %164 = sbr.rel (0) target = $region21
  $region20: #{tpu_custom_call.1} parent=0 // pred_region
    _
  $region21: #{tpu_custom_call.1} parent=0 // pred_fallthru
    _

// kernel: tpu_custom_call.1
$region0: #{tpu_custom_call.1}
  #allocation0 [shape = 'u32[]', space=smem, size = 0x4, offset = 0x4, fixed_abs, tag = 'smem constant byte address 0x4 - core index']
  #allocation1 [shape = 'u32[144,128]{1,0:T(1,128)}', space=vmem, size = 0x12000, scoped, tag = 'internal scratch']
  %s0 = inlined_call_operand.vmem [shape: f32[256,16], index: 0, kind: input, shape index: {}]
  %s1 = inlined_call_operand.vmem [shape: f32[1,16], index: 1, kind: input, shape index: {}]
  %s2 = inlined_call_operand.vmem [shape: f32[8,256], index: 2, kind: input, shape index: {}]
  %s3 = inlined_call_operand.vmem [shape: f32[16,8], index: 3, kind: output, shape index: {}]
  %s4 = sld [smem:[#allocation0]]
  $region22: #{tpu_custom_call.1} parent=0
    _
  %s6 = ssub.s32 1, %s4
  %s7 = scalar_select 0, %s6, %s4
  // Predicated region
  $region2: #{tpu_custom_call.1} parent=0 // pred_check
    _
  $region3: #{tpu_custom_call.1} parent=0 // pred_check_branch
    %9 = sbr.rel (0) target = $region5
  $region4: #{tpu_custom_call.1} parent=0 // pred_region
    _
  $region5: #{tpu_custom_call.1} parent=0 // pred_fallthru
    _
  // Predicated region
  $region6: #{tpu_custom_call.1} parent=0 // pred_check
    _
  $region7: #{tpu_custom_call.1} parent=0 // pred_check_branch
    %11 = sbr.rel (0) target = $region9
  $region8: #{tpu_custom_call.1} parent=0 // pred_region
    _
  $region9: #{tpu_custom_call.1} parent=0 // pred_fallthru
    _
  // Predicated region
  $region10: #{tpu_custom_call.1} parent=0 // pred_check
    _
  $region11: #{tpu_custom_call.1} parent=0 // pred_check_branch
    %13 = sbr.rel (0) target = $region13
  $region12: #{tpu_custom_call.1} parent=0 // pred_region
    _
  $region13: #{tpu_custom_call.1} parent=0 // pred_fallthru
    _
  %v14 = vld [vmem:[%s2] sm:$0xff]
  %v15 = vld [vmem:[%s2 + $0x8] sm:$0xff]
  %v16 = vld [vmem:[%s0] sm:$0xff]
  %v17 = vld [vmem:[%s0 + $0x8] sm:$0xff]
  %v18 = vld [vmem:[%s0 + $0x10] sm:$0xff]
  %v19 = vld [vmem:[%s0 + $0x18] sm:$0xff]
  %v20 = vld [vmem:[%s0 + $0x20] sm:$0xff]
  %v21 = vld [vmem:[%s0 + $0x28] sm:$0xff]
  %v22 = vld [vmem:[%s0 + $0x30] sm:$0xff]
  %v23 = vld [vmem:[%s0 + $0x38] sm:$0xff]
  %v24 = vld [vmem:[%s0 + $0x40] sm:$0xff]
  %v25 = vld [vmem:[%s0 + $0x48] sm:$0xff]
  %v26 = vld [vmem:[%s0 + $0x50] sm:$0xff]
  %v27 = vld [vmem:[%s0 + $0x58] sm:$0xff]
  %v28 = vld [vmem:[%s0 + $0x60] sm:$0xff]
  %v29 = vld [vmem:[%s0 + $0x68] sm:$0xff]
  %v30 = vld [vmem:[%s0 + $0x70] sm:$0xff]
  %v31 = vld [vmem:[%s0 + $0x78] sm:$0xff]
  %v32 = vld [vmem:[%s0 + $0x80] sm:$0xff]
  %v33 = vld [vmem:[%s0 + $0x88] sm:$0xff]
  %v34 = vld [vmem:[%s0 + $0x90] sm:$0xff]
  %v35 = vld [vmem:[%s0 + $0x98] sm:$0xff]
  %v36 = vld [vmem:[%s0 + $0xa0] sm:$0xff]
  %v37 = vld [vmem:[%s0 + $0xa8] sm:$0xff]
  %v38 = vld [vmem:[%s0 + $0xb0] sm:$0xff]
  %v39 = vld [vmem:[%s0 + $0xb8] sm:$0xff]
  %v40 = vld [vmem:[%s0 + $0xc0] sm:$0xff]
  %v41 = vld [vmem:[%s0 + $0xc8] sm:$0xff]
  %v42 = vld [vmem:[%s0 + $0xd0] sm:$0xff]
  %v43 = vld [vmem:[%s0 + $0xd8] sm:$0xff]
  %v44 = vld [vmem:[%s0 + $0xe0] sm:$0xff]
  %v45 = vld [vmem:[%s0 + $0xe8] sm:$0xff]
  %v46 = vld [vmem:[%s0 + $0xf0] sm:$0xff]
  %v47 = vld [vmem:[%s0 + $0xf8] sm:$0xff]
  %48 = vmatprep.subr.mxu0 0.0
  %49 = vmatpush1.msra.mxu0 %v16
  %50 = vmatprep.subr.mxu0 0.0
  %51 = vmatpush1.msra.mxu0 %v17
  %52 = vmatprep.subr.mxu0 0.0
  %53 = vmatpush1.msra.mxu0 %v18
  %54 = vmatprep.subr.mxu0 0.0
  %55 = vmatpush1.msra.mxu0 %v19
  %56 = vmatprep.subr.mxu0 0.0
  %57 = vmatpush1.msra.mxu0 %v20
  %58 = vmatprep.subr.mxu0 0.0
  %59 = vmatpush1.msra.mxu0 %v21
  %60 = vmatprep.subr.mxu0 0.0
  %61 = vmatpush1.msra.mxu0 %v22
  %62 = vmatprep.subr.mxu0 0.0
  %63 = vmatpush1.msra.mxu0 %v23
  %64 = vmatprep.subr.mxu0 0.0
  %65 = vmatpush1.msra.mxu0 %v24
  %66 = vmatprep.subr.mxu0 0.0
  %67 = vmatpush1.msra.mxu0 %v25
  %68 = vmatprep.subr.mxu0 0.0
  %69 = vmatpush1.msra.mxu0 %v26
  %70 = vmatprep.subr.mxu0 0.0
  %71 = vmatpush1.msra.mxu0 %v27
  %72 = vmatprep.subr.mxu0 0.0
  %73 = vmatpush1.msra.mxu0 %v28
  %74 = vmatprep.subr.mxu0 0.0
  %75 = vmatpush1.msra.mxu0 %v29
  %76 = vmatprep.subr.mxu0 0.0
  %77 = vmatpush1.msra.mxu0 %v30
  %78 = vmatprep.subr.mxu0 0.0
  %79 = vmatpush1.msra.mxu0 %v31
  %80 = vmatprep.subr.mxu0 0.0
  %81 = vmatpush1.msra.mxu0 %v32
  %82 = vmatprep.subr.mxu0 0.0
  %83 = vmatpush1.msra.mxu0 %v33
  %84 = vmatprep.subr.mxu0 0.0
  %85 = vmatpush1.msra.mxu0 %v34
  %86 = vmatprep.subr.mxu0 0.0
  %87 = vmatpush1.msra.mxu0 %v35
  %88 = vmatprep.subr.mxu0 0.0
  %89 = vmatpush1.msra.mxu0 %v36
  %90 = vmatprep.subr.mxu0 0.0
  %91 = vmatpush1.msra.mxu0 %v37
  %92 = vmatprep.subr.mxu0 0.0
  %93 = vmatpush1.msra.mxu0 %v38
  %94 = vmatprep.subr.mxu0 0.0
  %95 = vmatpush1.msra.mxu0 %v39
  %96 = vmatprep.subr.mxu0 0.0
  %97 = vmatpush1.msra.mxu0 %v40
  %98 = vmatprep.subr.mxu0 0.0
  %99 = vmatpush1.msra.mxu0 %v41
  %100 = vmatprep.subr.mxu0 0.0
  %101 = vmatpush1.msra.mxu0 %v42
  %102 = vmatprep.subr.mxu0 0.0
  %103 = vmatpush1.msra.mxu0 %v43
  %104 = vmatprep.subr.mxu0 0.0
  %105 = vmatpush1.msra.mxu0 %v44
  %106 = vmatprep.subr.mxu0 0.0
  %107 = vmatpush1.msra.mxu0 %v45
  %108 = vmatprep.subr.mxu0 0.0
  %109 = vmatpush1.msra.mxu0 %v46
  %110 = vmatprep.subr.mxu0 0.0
  %111 = vmatpush1.msra.mxu0 %v47
  %112 = vmatprep.mubr.f32.mxu0 %v15
  %113 = vmatmul.mubr.f32.gmra.mrb[0].mxu0 %v14
  %v114 = vpop.f32.mrb[0].mxu0
  %v115 = vadd.f32 0.0, %v114
  %v116 = vpop.f32.mrb[0].mxu0
  %117 = vdwg.mxu0
  %v118 = vld [vmem:[%s1] sm:$0x1]
  %v120 = vlaneseq
  %v121 = vshrl.u32 %v120, 7
  %v122 = vsub.s32 0, %v121
  %v123 = vrot.slane %v118, %v122
  %v125 = vmul.f32 %v115, %v123
  %126 = vxpose.xlu0.b32.start [1/16] %v125, 128
  %127 = vxpose.xlu0.b32.cont [2/16] 0.0, 128
  %128 = vxpose.xlu0.b32.cont [3/16] 0.0, 128
  %129 = vxpose.xlu0.b32.cont [4/16] 0.0, 128
  %130 = vxpose.xlu0.b32.cont [5/16] 0.0, 128
  %131 = vxpose.xlu0.b32.cont [6/16] 0.0, 128
  %132 = vxpose.xlu0.b32.cont [7/16] 0.0, 128
  %133 = vxpose.xlu0.b32.cont [8/16] 0.0, 128
  %134 = vxpose.xlu0.b32.cont [9/16] 0.0, 128
  %135 = vxpose.xlu0.b32.cont [10/16] 0.0, 128
  %136 = vxpose.xlu0.b32.cont [11/16] 0.0, 128
  %137 = vxpose.xlu0.b32.cont [12/16] 0.0, 128
  %138 = vxpose.xlu0.b32.cont [13/16] 0.0, 128
  %139 = vxpose.xlu0.b32.cont [14/16] 0.0, 128
  %140 = vxpose.xlu0.b32.cont [15/16] 0.0, 128
  %141 = vxpose.xlu0.b32.end [16/16] 0.0, 128
  %v142 = vpop.trf.xlu0
  %v143 = vpop.trf.xlu0
  %v144 = vpop.trf.xlu0
  %v145 = vpop.trf.xlu0
  %v146 = vpop.trf.xlu0
  %v147 = vpop.trf.xlu0
  %v148 = vpop.trf.xlu0
  %v149 = vpop.trf.xlu0
  %v150 = vpop.trf.xlu0
  %v151 = vpop.trf.xlu0
  %v152 = vpop.trf.xlu0
  %v153 = vpop.trf.xlu0
  %v154 = vpop.trf.xlu0
  %v155 = vpop.trf.xlu0
  %v156 = vpop.trf.xlu0
  %v157 = vpop.trf.xlu0
  %vm158 = vcmask 64512
  %159 = vst.msk [vmem:[%s3] sm:$0xff] %vm158, %v142
  %160 = vst.msk [vmem:[%s3 + $0x8] sm:$0xff] %vm158, %v143
  // Predicated region
  $region14: #{tpu_custom_call.1} parent=0 // pred_check
    _
  $region15: #{tpu_custom_call.1} parent=0 // pred_check_branch
    %162 = sbr.rel (0) target = $region17
  $region16: #{tpu_custom_call.1} parent=0 // pred_region
    _
  $region17: #{tpu_custom_call.1} parent=0 // pred_fallthru
    _
  // Predicated region
  $region18: #{tpu_custom_call.1} parent=0 // pred_check
    _
  $region19: #{tpu_custom_call.1} parent=0 // pred_check_branch
    %164 = sbr.rel (0) target = $region21
  $region20: #{tpu_custom_call.1} parent=0 // pred_region
    _
  $region21: #{tpu_custom_call.1} parent=0 // pred_fallthru
    _

</llo_original>
